<compile_context>
chip_gen: v7x
topology: tpu7x:2x2x1
jax: 0.10.0
libtpu: 0.0.40
codegen_flags: <defaults>
</compile_context>

<pallas_src>
import jax
import jax.numpy as jnp
from jax import lax
from jax.experimental import pallas as pl
from jax.experimental.pallas import tpu as pltpu


# --------------------------------------------------------------------------
# Flash (key-tiled, online-softmax) kernel.  grid = (B, N//TQ, N//TK)
# --------------------------------------------------------------------------
def _attention_flash_kernel(xq_ref, xk_ref, a_ref, wv_ref, gamma_ref, out_ref,
                            yq_ref, m_ref, l_ref, acc_ref):
    # xq_ref: (1, C, TQ) bf16   xk_ref: (1, C, TK) bf16
    # a_ref:  (C, C) bf16 folded Wk^T @ Wq      wv_ref: (C, C) bf16
    # gamma_ref: (1,) f32 scalar in SMEM        out_ref: (1, C, TQ) f32
    # scratch: yq_ref (C, TQ) bf16, m_ref/l_ref (1, TQ) f32, acc_ref (C, TQ) f32
    ki = pl.program_id(2)

    @pl.when(ki == 0)
    def _init():
        # Hoisted query projection: depends only on the query tile, reused for
        # every key tile of this (b, qi) grid point.
        xq = xq_ref[0]                                           # (C, TQ) bf16
        yq_ref[...] = jnp.dot(
            a_ref[...], xq, preferred_element_type=jnp.float32
        ).astype(jnp.bfloat16)
        m_ref[...] = jnp.full(m_ref.shape, -1e30, dtype=m_ref.dtype)
        l_ref[...] = jnp.zeros(l_ref.shape, dtype=l_ref.dtype)
        acc_ref[...] = jnp.zeros(acc_ref.shape, dtype=acc_ref.dtype)

    xk = xk_ref[0]                                               # (C, TK) bf16

    # Score tile s[j, i] = sum_c xk[c, j] * yq[c, i]  (== energy[i, j]).
    # Contract axis 0 of both operands -> no explicit transpose / extra cast.
    s = lax.dot_general(
        xk, yq_ref[...],
        dimension_numbers=(((0,), (0,)), ((), ())),
        preferred_element_type=jnp.float32)                      # (TK, TQ) f32

    # Online softmax over the key axis (axis 0); stats stay in f32.
    m_prev = m_ref[...]                                          # (1, TQ)
    m_new = jnp.maximum(m_prev, jnp.max(s, axis=0, keepdims=True))
    alpha = jnp.exp(m_prev - m_new)                              # (1, TQ)
    p = jnp.exp(s - m_new)                                       # (TK, TQ)
    l_ref[...] = alpha * l_ref[...] + jnp.sum(p, axis=0, keepdims=True)
    m_ref[...] = m_new

    # Deferred value projection: accumulate in key space,
    #   acc[c, i] = alpha * acc[c, i] + sum_j xk[c, j] * p[j, i]
    # and apply Wv once at finalize (Wv is linear, commutes with the sum).
    acc_ref[...] = alpha * acc_ref[...] + jnp.dot(
        xk, p.astype(jnp.bfloat16), preferred_element_type=jnp.float32)

    @pl.when(ki == pl.num_programs(2) - 1)
    def _finalize():
        inv_l = pl.reciprocal(l_ref[...], approx=True)           # (1, TQ)
        acc_n = (acc_ref[...] * inv_l).astype(jnp.bfloat16)      # (C, TQ)
        o = jnp.dot(wv_ref[...], acc_n,
                    preferred_element_type=jnp.float32)          # (C, TQ)
        residual = xq_ref[0].astype(jnp.float32)
        out_ref[0] = (gamma_ref[0] * o + residual).astype(out_ref.dtype)


# --------------------------------------------------------------------------
# Single-pass kernel (whole key axis resident).  grid = (B, N//TQ)
# --------------------------------------------------------------------------
def _attention_single_kernel(xq_ref, xk_ref, a_ref, wv_ref, gamma_ref, out_ref):
    xq = xq_ref[0]                                               # (C, TQ) bf16
    xk = xk_ref[0]                                               # (C, N)  bf16

    yq = jnp.dot(a_ref[...], xq,
                 preferred_element_type=jnp.float32).astype(jnp.bfloat16)
    s = lax.dot_general(
        xk, yq,
        dimension_numbers=(((0,), (0,)), ((), ())),
        preferred_element_type=jnp.float32)                      # (N, TQ) f32

    m = jnp.max(s, axis=0, keepdims=True)                        # (1, TQ)
    p = jnp.exp(s - m)                                           # (N, TQ)
    l = jnp.sum(p, axis=0, keepdims=True)                        # (1, TQ)
    inv_l = pl.reciprocal(l, approx=True)

    acc = jnp.dot(xk, p.astype(jnp.bfloat16),
                  preferred_element_type=jnp.float32)            # (C, TQ)
    acc_n = (acc * inv_l).astype(jnp.bfloat16)
    o = jnp.dot(wv_ref[...], acc_n, preferred_element_type=jnp.float32)
    out_ref[0] = (gamma_ref[0] * o + xq.astype(jnp.float32)).astype(out_ref.dtype)


def _pick_tile(n, preferred=(512, 256, 128)):
    for t in preferred:
        if n % t == 0:
            return t
    return n  # full extent (allowed: block dim == array dim)


def attention_mod(x_nchw, wq, wk, wv, gamma, *, tq=None, tk=None):
    """x_nchw: (B, C, H, W).  wq/wk: (C//8, C), wv: (C, C) -- PyTorch 1x1 conv
    weights with the trailing 1x1 squeezed.  gamma: (1,) scalar parameter."""
    B, C, H, W = x_nchw.shape
    N = H * W

    # Channel-major layout, bf16 in HBM (halves the key-tile DMA stream).
    x_cn = x_nchw.reshape(B, C, N).astype(jnp.bfloat16)

    # Fold the query/key projections: energy = x_k^T (Wk^T Wq) x_q.
    # Built in f32, stored bf16 for the MXU.
    a_fold = (wk.astype(jnp.float32).T @ wq.astype(jnp.float32)).astype(jnp.bfloat16)
    wv_b = wv.astype(jnp.bfloat16)
    gamma = jnp.asarray(gamma, jnp.float32).reshape((1,))

    if N % 128 != 0:
        # TODO(synk): pad N to a multiple of 128 and mask padded keys; for now
        # fall back to full-extent blocks (valid, but stores may be masked).
        tq = tq or N
        tk = tk or N
    else:
        if tq is None:
            tq = _pick_tile(N)
        if tk is None:
            # Single-pass when the (N, TQ) f32 score tile + (C, N) bf16 key
            # tile fit a modest VMEM budget (conservative for v7x's 64 MiB).
            single_bytes = N * tq * 4 + 2 * C * N * 2 + 2 * C * tq * 4
            tk = N if single_bytes <= 16 * 1024 * 1024 else _pick_tile(N)
    assert N % tq == 0 and N % tk == 0

    out_shape = jax.ShapeDtypeStruct((B, C, N), jnp.float32)

    if tk == N:
        # ---------------- single-pass path ----------------
        out_cn = pl.pallas_call(
            _attention_single_kernel,
            out_shape=out_shape,
            grid=(B, N // tq),
            in_specs=[
                pl.BlockSpec((1, C, tq), lambda b, qi: (b, 0, qi)),  # query tile
                pl.BlockSpec((1, C, N), lambda b, qi: (b, 0, 0)),    # all keys
                pl.BlockSpec((C, C), lambda b, qi: (0, 0)),          # folded A
                pl.BlockSpec((C, C), lambda b, qi: (0, 0)),          # Wv
                pl.BlockSpec(memory_space=pltpu.MemorySpace.SMEM),   # gamma
            ],
            out_specs=pl.BlockSpec((1, C, tq), lambda b, qi: (b, 0, qi)),
            compiler_params=pltpu.CompilerParams(
                # both axes parallel -> shards across v7x's 2 TensorCores
                dimension_semantics=("parallel", "parallel"),
                vmem_limit_bytes=48 * 1024 * 1024,
            ),
        )(x_cn, x_cn, a_fold, wv_b, gamma)
    else:
        # ---------------- flash (key-tiled) path ----------------
        out_cn = pl.pallas_call(
            _attention_flash_kernel,
            out_shape=out_shape,
            grid=(B, N // tq, N // tk),
            in_specs=[
                pl.BlockSpec((1, C, tq), lambda b, qi, ki: (b, 0, qi)),  # query tile
                pl.BlockSpec((1, C, tk), lambda b, qi, ki: (b, 0, ki)),  # key tile
                pl.BlockSpec((C, C), lambda b, qi, ki: (0, 0)),          # folded A
                pl.BlockSpec((C, C), lambda b, qi, ki: (0, 0)),          # Wv
                pl.BlockSpec(memory_space=pltpu.MemorySpace.SMEM),       # gamma
            ],
            out_specs=pl.BlockSpec((1, C, tq), lambda b, qi, ki: (b, 0, qi)),
            scratch_shapes=[
                pltpu.VMEM((C, tq), jnp.bfloat16),  # hoisted yq = A @ xq
                pltpu.VMEM((1, tq), jnp.float32),   # running max  m
                pltpu.VMEM((1, tq), jnp.float32),   # running sum  l
                pltpu.VMEM((C, tq), jnp.float32),   # key-space accumulator
            ],
            compiler_params=pltpu.CompilerParams(
                dimension_semantics=("parallel", "parallel", "arbitrary"),
                vmem_limit_bytes=48 * 1024 * 1024,
            ),
        )(x_cn, x_cn, a_fold, wv_b, gamma)

    return out_cn.reshape(B, C, H, W)


def _reference(x_nchw, wq, wk, wv, gamma):
    """Pure-JAX f32 mirror of the PyTorch forward (NCHW, norm_layer=None)."""
    B, C, H, W = x_nchw.shape
    N = H * W
    x = x_nchw.reshape(B, C, N)                               # (B, C, N)
    q = jnp.einsum('oc,bcn->bon', wq, x)                      # (B, Cq, N)
    k = jnp.einsum('oc,bcn->bon', wk, x)                      # (B, Cq, N)
    v = jnp.einsum('oc,bcn->bon', wv, x)                      # (B, C, N)
    energy = jnp.einsum('bqi,bqj->bij', q, k)                 # (B, N, N)
    attn = jax.nn.softmax(energy, axis=-1)
    out = jnp.einsum('bcj,bij->bci', v, attn)                 # (B, C, N)
    out = gamma[0] * out + x
    return out.reshape(B, C, H, W)


if __name__ == "__main__":
    key = jax.random.PRNGKey(0)
    B, C, H, W = 2, 16, 16, 16        # N = 256
    Cq = C // 8

    k_x, k_q, k_k, k_v = jax.random.split(key, 4)
    x = jax.random.normal(k_x, (B, C, H, W), dtype=jnp.float32)

    # kaiming_normal_(a=1) on 1x1 convs: std = sqrt(2/((1+a^2)*fan_in)) = 1/sqrt(C)
    std = 1.0 / jnp.sqrt(jnp.float32(C))
    wq = jax.random.normal(k_q, (Cq, C), dtype=jnp.float32) * std
    wk = jax.random.normal(k_k, (Cq, C), dtype=jnp.float32) * std
    wv = jax.random.normal(k_v, (C, C), dtype=jnp.float32) * std
    # PyTorch inits gamma to 0 (out == x); use a nonzero value so the
    # attention path is actually exercised.
    gamma = jnp.array([0.5], dtype=jnp.float32)

    ref = _reference(x, wq, wk, wv, gamma)

    # 1) flash path: tq = tk = 128 exercises the multi-tile online softmax.
    out_flash = jax.block_until_ready(attention_mod(x, wq, wk, wv, gamma, tq=128, tk=128))
    assert out_flash.shape == (B, C, H, W)
    err_f = float(jnp.max(jnp.abs(out_flash - ref)))
    assert jnp.allclose(out_flash, ref, atol=7.5e-2, rtol=7.5e-2), \
        f"flash path mismatch vs reference (max abs err {err_f})"

    # 2) default tile selection: single-pass path (TK == N) at this size.
    out_single = jax.block_until_ready(attention_mod(x, wq, wk, wv, gamma))
    err_s = float(jnp.max(jnp.abs(out_single - ref)))
    assert jnp.allclose(out_single, ref, atol=7.5e-2, rtol=7.5e-2), \
        f"single-pass path mismatch vs reference (max abs err {err_s})"

    print("KERNEL_OK")
</pallas_src>

<mosaic_0001>
module attributes {stable_mosaic.version = 11 : i64} {
  func.func @_attention_flash_kernel(%arg0: i32, %arg1: i32, %arg2: i32, %arg3: memref<1x16x128xbf16, #tpu.memory_space<vmem>>, %arg4: memref<1x16x128xbf16, #tpu.memory_space<vmem>>, %arg5: memref<16x16xbf16, #tpu.memory_space<vmem>>, %arg6: memref<16x16xbf16, #tpu.memory_space<vmem>>, %arg7: memref<1xf32, #tpu.memory_space<smem>>, %arg8: memref<1x16x128xf32, #tpu.memory_space<vmem>>, %arg9: memref<16x128xbf16, #tpu.memory_space<vmem>>, %arg10: memref<1x128xf32, #tpu.memory_space<vmem>>, %arg11: memref<1x128xf32, #tpu.memory_space<vmem>>, %arg12: memref<16x128xf32, #tpu.memory_space<vmem>>) attributes {dimension_semantics = [#tpu.dimension_semantics<parallel>, #tpu.dimension_semantics<parallel>, #tpu.dimension_semantics<arbitrary>], iteration_bounds = array<i64: 2, 2, 2>, scalar_prefetch = 0 : i64, scratch_operands = 4 : i64, tpu.core_type = #tpu.core_type<tc>, window_params = [{transform_indices = @transform_0, window_bounds = array<i64: 1, 16, 128>}, {transform_indices = @transform_1, window_bounds = array<i64: 1, 16, 128>}, {pipeline_mode = #tpu.pipeline_mode<synchronous>, transform_indices = @transform_2, window_bounds = array<i64: 16, 16>}, {pipeline_mode = #tpu.pipeline_mode<synchronous>, transform_indices = @transform_3, window_bounds = array<i64: 16, 16>}, {transform_indices = @transform_4, window_bounds = array<i64: 1>}, {transform_indices = @transform_5, window_bounds = array<i64: 1, 16, 128>}]} {
    %c0_i32 = arith.constant 0 : i32
    %0 = arith.cmpi eq, %arg2, %c0_i32 : i32
    %1 = arith.extui %0 : i1 to i32
    %c0_i32_0 = arith.constant 0 : i32
    %2 = arith.cmpi ne, %1, %c0_i32_0 : i32
    scf.if %2 {
      %c0_21 = arith.constant 0 : index
      %c0_22 = arith.constant 0 : index
      %c0_23 = arith.constant 0 : index
      %33 = vector.load %arg3[%c0_21, %c0_22, %c0_23] : memref<1x16x128xbf16, #tpu.memory_space<vmem>>, vector<1x16x128xbf16>
      %34 = vector.shape_cast %33 : vector<1x16x128xbf16> to vector<16x128xbf16>
      %c0_24 = arith.constant 0 : index
      %c0_25 = arith.constant 0 : index
      %35 = vector.load %arg5[%c0_24, %c0_25] : memref<16x16xbf16, #tpu.memory_space<vmem>>, vector<16x16xbf16>
      %cst_26 = arith.constant dense<0.000000e+00> : vector<16x128xf32>
      %36 = tpu.matmul %35, %34, %cst_26 {dimension_numbers = #tpu.dot_dimension_numbers<[1], [0], [0], [1], [0, 0, 1, 1], [], []>} : vector<16x16xbf16>, vector<16x128xbf16>, vector<16x128xf32> -> vector<16x128xf32>
      %37 = arith.truncf %36 : vector<16x128xf32> to vector<16x128xbf16>
      %c0_27 = arith.constant 0 : index
      %c0_28 = arith.constant 0 : index
      %38 = vector.load %arg9[%c0_27, %c0_28] : memref<16x128xbf16, #tpu.memory_space<vmem>>, vector<16x128xbf16>
      tpu.vector_store %arg9[%c0_27, %c0_28], %37 {strides = array<i32>} : memref<16x128xbf16, #tpu.memory_space<vmem>>, vector<16x128xbf16>,
      %cst_29 = arith.constant -1.000000e+30 : f32
      %39 = vector.broadcast %cst_29 : f32 to vector<1x128xf32>
      %c0_30 = arith.constant 0 : index
      %c0_31 = arith.constant 0 : index
      %40 = vector.load %arg10[%c0_30, %c0_31] : memref<1x128xf32, #tpu.memory_space<vmem>>, vector<1x128xf32>
      tpu.vector_store %arg10[%c0_30, %c0_31], %39 {strides = array<i32>} : memref<1x128xf32, #tpu.memory_space<vmem>>, vector<1x128xf32>,
      %cst_32 = arith.constant 0.000000e+00 : f32
      %41 = vector.broadcast %cst_32 : f32 to vector<1x128xf32>
      %c0_33 = arith.constant 0 : index
      %c0_34 = arith.constant 0 : index
      %42 = vector.load %arg11[%c0_33, %c0_34] : memref<1x128xf32, #tpu.memory_space<vmem>>, vector<1x128xf32>
      tpu.vector_store %arg11[%c0_33, %c0_34], %41 {strides = array<i32>} : memref<1x128xf32, #tpu.memory_space<vmem>>, vector<1x128xf32>,
      %cst_35 = arith.constant 0.000000e+00 : f32
      %43 = vector.broadcast %cst_35 : f32 to vector<16x128xf32>
      %c0_36 = arith.constant 0 : index
      %c0_37 = arith.constant 0 : index
      %44 = vector.load %arg12[%c0_36, %c0_37] : memref<16x128xf32, #tpu.memory_space<vmem>>, vector<16x128xf32>
      tpu.vector_store %arg12[%c0_36, %c0_37], %43 {strides = array<i32>} : memref<16x128xf32, #tpu.memory_space<vmem>>, vector<16x128xf32>,
    } else {
    }
    %c0 = arith.constant 0 : index
    %c0_1 = arith.constant 0 : index
    %c0_2 = arith.constant 0 : index
    %3 = vector.load %arg4[%c0, %c0_1, %c0_2] : memref<1x16x128xbf16, #tpu.memory_space<vmem>>, vector<1x16x128xbf16>
    %4 = vector.shape_cast %3 : vector<1x16x128xbf16> to vector<16x128xbf16>
    %c0_3 = arith.constant 0 : index
    %c0_4 = arith.constant 0 : index
    %5 = vector.load %arg9[%c0_3, %c0_4] : memref<16x128xbf16, #tpu.memory_space<vmem>>, vector<16x128xbf16>
    %cst = arith.constant dense<0.000000e+00> : vector<128x128xf32>
    %6 = tpu.matmul %4, %5, %cst {dimension_numbers = #tpu.dot_dimension_numbers<[0], [0], [1], [1], [0, 1, 1, 1], [], []>} : vector<16x128xbf16>, vector<16x128xbf16>, vector<128x128xf32> -> vector<128x128xf32>
    %c0_5 = arith.constant 0 : index
    %c0_6 = arith.constant 0 : index
    %7 = vector.load %arg10[%c0_5, %c0_6] : memref<1x128xf32, #tpu.memory_space<vmem>>, vector<1x128xf32>
    %cst_7 = arith.constant dense<0xFF800000> : vector<128xf32>
    %8 = vector.multi_reduction <maximumf>, %6, %cst_7 [0] : vector<128x128xf32> to vector<128xf32>
    %9 = vector.shape_cast %8 : vector<128xf32> to vector<1x128xf32>
    %10 = arith.maximumf %7, %9 : vector<1x128xf32>
    %11 = arith.subf %7, %10 : vector<1x128xf32>
    %12 = math.exp %11 : vector<1x128xf32>
    %13 = vector.broadcast %10 : vector<1x128xf32> to vector<128x128xf32>
    %14 = arith.subf %6, %13 : vector<128x128xf32>
    %15 = math.exp %14 : vector<128x128xf32>
    %c0_8 = arith.constant 0 : index
    %c0_9 = arith.constant 0 : index
    %16 = vector.load %arg11[%c0_8, %c0_9] : memref<1x128xf32, #tpu.memory_space<vmem>>, vector<1x128xf32>
    %17 = arith.mulf %12, %16 : vector<1x128xf32>
    %cst_10 = arith.constant dense<0.000000e+00> : vector<128xf32>
    %18 = vector.multi_reduction <add>, %15, %cst_10 [0] : vector<128x128xf32> to vector<128xf32>
    %19 = vector.shape_cast %18 : vector<128xf32> to vector<1x128xf32>
    %20 = arith.addf %17, %19 : vector<1x128xf32>
    %c0_11 = arith.constant 0 : index
    %c0_12 = arith.constant 0 : index
    %21 = vector.load %arg11[%c0_11, %c0_12] : memref<1x128xf32, #tpu.memory_space<vmem>>, vector<1x128xf32>
    tpu.vector_store %arg11[%c0_11, %c0_12], %20 {strides = array<i32>} : memref<1x128xf32, #tpu.memory_space<vmem>>, vector<1x128xf32>,
    %c0_13 = arith.constant 0 : index
    %c0_14 = arith.constant 0 : index
    %22 = vector.load %arg10[%c0_13, %c0_14] : memref<1x128xf32, #tpu.memory_space<vmem>>, vector<1x128xf32>
    tpu.vector_store %arg10[%c0_13, %c0_14], %10 {strides = array<i32>} : memref<1x128xf32, #tpu.memory_space<vmem>>, vector<1x128xf32>,
    %c0_15 = arith.constant 0 : index
    %c0_16 = arith.constant 0 : index
    %23 = vector.load %arg12[%c0_15, %c0_16] : memref<16x128xf32, #tpu.memory_space<vmem>>, vector<16x128xf32>
    %24 = vector.broadcast %12 : vector<1x128xf32> to vector<16x128xf32>
    %25 = arith.mulf %24, %23 : vector<16x128xf32>
    %26 = arith.truncf %15 : vector<128x128xf32> to vector<128x128xbf16>
    %cst_17 = arith.constant dense<0.000000e+00> : vector<16x128xf32>
    %27 = tpu.matmul %4, %26, %cst_17 {dimension_numbers = #tpu.dot_dimension_numbers<[1], [0], [0], [1], [0, 0, 1, 1], [], []>} : vector<16x128xbf16>, vector<128x128xbf16>, vector<16x128xf32> -> vector<16x128xf32>
    %28 = arith.addf %25, %27 : vector<16x128xf32>
    %c0_18 = arith.constant 0 : index
    %c0_19 = arith.constant 0 : index
    %29 = vector.load %arg12[%c0_18, %c0_19] : memref<16x128xf32, #tpu.memory_space<vmem>>, vector<16x128xf32>
    tpu.vector_store %arg12[%c0_18, %c0_19], %28 {strides = array<i32>} : memref<16x128xf32, #tpu.memory_space<vmem>>, vector<16x128xf32>,
    %c1_i32 = arith.constant 1 : i32
    %30 = arith.cmpi eq, %arg2, %c1_i32 : i32
    %31 = arith.extui %30 : i1 to i32
    %c0_i32_20 = arith.constant 0 : i32
    %32 = arith.cmpi ne, %31, %c0_i32_20 : i32
    scf.if %32 {
      %c0_21 = arith.constant 0 : index
      %c0_22 = arith.constant 0 : index
      %33 = vector.load %arg11[%c0_21, %c0_22] : memref<1x128xf32, #tpu.memory_space<vmem>>, vector<1x128xf32>
      %34 = tpu.reciprocal %33 {approx = true} : vector<1x128xf32> -> vector<1x128xf32>
      %c0_23 = arith.constant 0 : index
      %c0_24 = arith.constant 0 : index
      %35 = vector.load %arg12[%c0_23, %c0_24] : memref<16x128xf32, #tpu.memory_space<vmem>>, vector<16x128xf32>
      %36 = vector.broadcast %34 : vector<1x128xf32> to vector<16x128xf32>
      %37 = arith.mulf %35, %36 : vector<16x128xf32>
      %38 = arith.truncf %37 : vector<16x128xf32> to vector<16x128xbf16>
      %c0_25 = arith.constant 0 : index
      %c0_26 = arith.constant 0 : index
      %39 = vector.load %arg6[%c0_25, %c0_26] : memref<16x16xbf16, #tpu.memory_space<vmem>>, vector<16x16xbf16>
      %cst_27 = arith.constant dense<0.000000e+00> : vector<16x128xf32>
      %40 = tpu.matmul %39, %38, %cst_27 {dimension_numbers = #tpu.dot_dimension_numbers<[1], [0], [0], [1], [0, 0, 1, 1], [], []>} : vector<16x16xbf16>, vector<16x128xbf16>, vector<16x128xf32> -> vector<16x128xf32>
      %c0_28 = arith.constant 0 : index
      %c0_29 = arith.constant 0 : index
      %c0_30 = arith.constant 0 : index
      %41 = vector.load %arg3[%c0_28, %c0_29, %c0_30] : memref<1x16x128xbf16, #tpu.memory_space<vmem>>, vector<1x16x128xbf16>
      %42 = vector.shape_cast %41 : vector<1x16x128xbf16> to vector<16x128xbf16>
      %43 = arith.extf %42 : vector<16x128xbf16> to vector<16x128xf32>
      %c0_31 = arith.constant 0 : index
      %44 = memref.load %arg7[%c0_31] : memref<1xf32, #tpu.memory_space<smem>>
      %45 = vector.broadcast %44 : f32 to vector<16x128xf32>
      %46 = arith.mulf %45, %40 : vector<16x128xf32>
      %47 = arith.addf %46, %43 : vector<16x128xf32>
      %c0_32 = arith.constant 0 : index
      %c0_33 = arith.constant 0 : index
      %c0_34 = arith.constant 0 : index
      %48 = vector.load %arg8[%c0_32, %c0_33, %c0_34] : memref<1x16x128xf32, #tpu.memory_space<vmem>>, vector<1x16x128xf32>
      %49 = vector.shape_cast %48 : vector<1x16x128xf32> to vector<16x128xf32>
      %50 = vector.shape_cast %47 : vector<16x128xf32> to vector<1x16x128xf32>
      tpu.vector_store %arg8[%c0_32, %c0_33, %c0_34], %50 {strides = array<i32>} : memref<1x16x128xf32, #tpu.memory_space<vmem>>, vector<1x16x128xf32>,
    } else {
    }
    return
  }
  func.func @transform_0(%arg0: i32, %arg1: i32, %arg2: i32) -> (i32, i32, i32) {
    %c0_i32 = arith.constant 0 : i32
    %c0_i32_0 = arith.constant 0 : i32
    return %arg0, %c0_i32, %arg1 : i32, i32, i32
  }
  func.func @transform_1(%arg0: i32, %arg1: i32, %arg2: i32) -> (i32, i32, i32) {
    %c0_i32 = arith.constant 0 : i32
    %c0_i32_0 = arith.constant 0 : i32
    return %arg0, %c0_i32, %arg2 : i32, i32, i32
  }
  func.func @transform_2(%arg0: i32, %arg1: i32, %arg2: i32) -> (i32, i32) {
    %c0_i32 = arith.constant 0 : i32
    %c0_i32_0 = arith.constant 0 : i32
    %c0_i32_1 = arith.constant 0 : i32
    return %c0_i32, %c0_i32_0 : i32, i32
  }
  func.func @transform_3(%arg0: i32, %arg1: i32, %arg2: i32) -> (i32, i32) {
    %c0_i32 = arith.constant 0 : i32
    %c0_i32_0 = arith.constant 0 : i32
    %c0_i32_1 = arith.constant 0 : i32
    return %c0_i32, %c0_i32_0 : i32, i32
  }
  func.func @transform_4(%arg0: i32, %arg1: i32, %arg2: i32) -> i32 {
    %c0_i32 = arith.constant 0 : i32
    %c0_i32_0 = arith.constant 0 : i32
    return %c0_i32 : i32
  }
  func.func @transform_5(%arg0: i32, %arg1: i32, %arg2: i32) -> (i32, i32, i32) {
    %c0_i32 = arith.constant 0 : i32
    %c0_i32_0 = arith.constant 0 : i32
    return %arg0, %c0_i32, %arg1 : i32, i32, i32
  }
}

</mosaic_0001>

<llo_original>
// kernel: tpu_custom_call.1
$region0: #{tpu_custom_call.1}
  #allocation0 [shape = 'u32[]', space=smem, size = 0x4, offset = 0x4, fixed_abs, tag = 'smem constant byte address 0x4 - core index']
  #allocation1 [shape = 'u32[144,128]{1,0:T(1,128)}', space=vmem, size = 0x12000, scoped, tag = 'internal scratch']
  #allocation2 [shape = 'bf16[16,128]{1,0:T(16,128)(2,1)}', space=vmem, size = 0x1000, scoped, tag = 'scratch operand']
  #allocation3 [shape = 'f32[1,128]{1,0:T(1,128)}', space=vmem, size = 0x200, scoped, tag = 'scratch operand']
  #allocation4 [shape = 'f32[1,128]{1,0:T(1,128)}', space=vmem, size = 0x200, scoped, tag = 'scratch operand']
  #allocation5 [shape = 'f32[16,128]{1,0:T(8,128)}', space=vmem, size = 0x2000, scoped, tag = 'scratch operand']
  #allocation6 [shape = 'f32[1]{0:T(128)S(6)}', space=smem, size = 0x200, scoped, tag = 'scoped memory for tpu_custom_call.1']
  %s0 = inlined_call_operand.hbm [shape: bf16[2,16,256], index: 0, kind: input, shape index: {}]
  %s1 = inlined_call_operand.hbm [shape: bf16[2,16,256], index: 1, kind: input, shape index: {}]
  %s2 = inlined_call_operand.vmem [shape: bf16[16,16], index: 2, kind: input, shape index: {}]
  %s3 = inlined_call_operand.hbm [shape: bf16[16,16], index: 3, kind: input, shape index: {}]
  %s4 = inlined_call_operand.<no memory space> [shape: f32[1], index: 4, kind: input, shape index: {}]
  %s5 = inlined_call_operand.hbm [shape: f32[2,16,256], index: 5, kind: output, shape index: {}]
  %s6 = sld [smem:[#allocation0]]
  $region73: #{tpu_custom_call.1} parent=0
    _
  %s8 = ssub.s32 1, %s6
  %s9 = scalar_select 0, %s8, %s6
  %10 = sst [smem:[#allocation6]] %s4
  $region1: #{tpu_custom_call.1} parent=0
    #allocation7 [shape = 'u8[8192]{0}', space=vmem, size = 0x2000, scoped, tag = 'input window, operand 0']
    #allocation8 [shape = 's32[2]{0}', space=sflag, size = 0x8, scoped, tag = 'scoped memory for tpu_custom_call.1']
    #allocation9 [shape = 's32[2]{0}', space=sflag, size = 0x8, scoped, tag = 'scoped memory for tpu_custom_call.1']
    #allocation10 [shape = 'u8[8192]{0}', space=vmem, size = 0x2000, scoped, tag = 'input window, operand 1']
    #allocation11 [shape = 's32[2]{0}', space=sflag, size = 0x8, scoped, tag = 'scoped memory for tpu_custom_call.1']
    #allocation12 [shape = 'u8[4096]{0}', space=vmem, size = 0x1000, scoped, tag = 'input window, operand 3, single buffered']
    #allocation13 [shape = 'u8[16384]{0}', space=vmem, size = 0x4000, scoped, tag = 'output window, operand 0']
    %11 = vsyncpa [#allocation8], 0
    %s12 = scalar_lea.sflag [#allocation8], 1
    %13 = vsyncpa %s12, 0
    %14 = vsyncpa [#allocation11], 0
    %s15 = scalar_lea.sflag [#allocation11], 1
    %16 = vsyncpa %s15, 0
    %17 = vsyncpa [#allocation9], 0
    %s18 = scalar_lea.sflag [#allocation9], 1
    %19 = vsyncpa %s18, 0
    loop: start=0, step=1, limit=10
    $region2: #{tpu_custom_call.1} parent=1 // loop_pre_header
      _
    $region3: #{tpu_custom_call.1} parent=1 // loop_header
      %s21 = sphi 0, %s25
      %p22 = scmp.ge.s32.totalorder %s21, 10
      %s28 = sphi 0, %s47
      %s29 = sphi 0, %s43
      %s30 = sphi 0, %s39
      %s31 = sphi 0, %s28
      %s32 = sphi 0, %s29
      %s33 = sphi 0, %s30
      %s34 = sphi 0, %s31
      %s35 = sphi 0, %s32
      %s36 = sphi 0, %s33
      %s52 = sphi 0, %s54
      %s55 = sphi 0, %s52
      %s56 = sphi 0, %s55
      %s72 = sphi 0, %s56
      %s80 = sphi 0, %s82
      %s83 = sphi 0, %s80
      %s84 = sphi 0, %s83
      %s100 = sphi 0, %s84
      %s104 = sphi 0, %s104
      %s106 = sphi 0, %s104
      %s107 = sphi 0, %s106
      %s121 = sphi 0, %s107
      %s125 = sphi 0, %s125
      %s127 = sphi 0, %s125
      %s128 = sphi 0, %s127
      %s142 = sphi 0, %s128
      %s146 = sphi 0, %s146
      %s148 = sphi 0, %s146
      %s149 = sphi 0, %s148
      %s163 = sphi 0, %s149
      %s171 = sphi 0, %s173
      %s174 = sphi 0, %s171
      %s175 = sphi 0, %s174
      %s191 = sphi 0, %s175
    $region4: #{tpu_custom_call.1} parent=1 // loop_header_branch
      %24 = sbr.rel (%p22) target = $region8
    $region5: #{tpu_custom_call.1} parent=1 // loop_body
      %s26 = ssub.s32 %s21, 1
      %s27 = ssub.s32 %s21, 2
      %s37 = sadd.s32 1, %s30
      %p38 = scmp.ge.s32.totalorder %s37, 2
      %s39 = scalar_select %p38, 0, %s37
      %s40 = sadd.s32 1, %s29
      %s41 = scalar_select %p38, %s40, %s29
      %p42 = scmp.ge.s32.totalorder %s41, 2
      %s43 = scalar_select %p42, 0, %s41
      %s44 = sadd.s32 1, %s28
      %s45 = scalar_select %p42, %s44, %s28
      %p46 = scmp.ge.s32.totalorder %s45, 2
      %s47 = scalar_select %p46, 0, %s45
      %s48 = ssub.s32 %s28, %s47
      %s49 = ssub.s32 %s29, %s43
      %s50 = sor.u32 %s48, %s49
      %p51 = scmp.eq.s32.totalorder %s50, 0
      %s53 = sadd.s32 %s52, 1
      %s54 = scalar_select %p51, %s52, %s53
      %p57 = pneg %p51
      %p58 = scmp.eq.s32.totalorder %s21, 7
      %p59 = por %p57, %p58
      %p60 = scmp.ne.s32.totalorder %s52, %s55
      %p61 = scmp.eq.s32.totalorder %s21, 0
      %p62 = por %p60, %p61
      %p63 = scmp.ne.s32.totalorder %s52, %s55
      %p64 = scmp.eq.s32.totalorder %s26, 7
      %p65 = por %p63, %p64
      %p66 = scmp.ne.s32.totalorder %s55, %s56
      %p67 = scmp.eq.s32.totalorder %s26, 0
      %p68 = por %p66, %p67
      %p69 = scmp.ne.s32.totalorder %s55, %s56
      %p70 = scmp.eq.s32.totalorder %s27, 7
      %p71 = por %p69, %p70
      %p73 = scmp.ne.s32.totalorder %s56, %s72
      %p74 = scmp.eq.s32.totalorder %s27, 0
      %p75 = por %p73, %p74
      %s76 = ssub.s32 %s28, %s47
      %s77 = ssub.s32 %s30, %s39
      %s78 = sor.u32 %s76, %s77
      %p79 = scmp.eq.s32.totalorder %s78, 0
      %s81 = sadd.s32 %s80, 1
      %s82 = scalar_select %p79, %s80, %s81
      %p85 = pneg %p79
      %p86 = scmp.eq.s32.totalorder %s21, 7
      %p87 = por %p85, %p86
      %p88 = scmp.ne.s32.totalorder %s80, %s83
      %p89 = scmp.eq.s32.totalorder %s21, 0
      %p90 = por %p88, %p89
      %p91 = scmp.ne.s32.totalorder %s80, %s83
      %p92 = scmp.eq.s32.totalorder %s26, 7
      %p93 = por %p91, %p92
      %p94 = scmp.ne.s32.totalorder %s83, %s84
      %p95 = scmp.eq.s32.totalorder %s26, 0
      %p96 = por %p94, %p95
      %p97 = scmp.ne.s32.totalorder %s83, %s84
      %p98 = scmp.eq.s32.totalorder %s27, 7
      %p99 = por %p97, %p98
      %p101 = scmp.ne.s32.totalorder %s84, %s100
      %p102 = scmp.eq.s32.totalorder %s27, 0
      %p103 = por %p101, %p102
      %s105 = sadd.s32 %s104, 1
      %p108 = scmp.eq.s32.totalorder %s21, 7
      %p109 = scmp.ne.s32.totalorder %s104, %s106
      %p110 = scmp.eq.s32.totalorder %s21, 0
      %p111 = por %p109, %p110
      %p112 = scmp.ne.s32.totalorder %s104, %s106
      %p113 = scmp.eq.s32.totalorder %s26, 7
      %p114 = por %p112, %p113
      %p115 = scmp.ne.s32.totalorder %s106, %s107
      %p116 = scmp.eq.s32.totalorder %s26, 0
      %p117 = por %p115, %p116
      %p118 = scmp.ne.s32.totalorder %s106, %s107
      %p119 = scmp.eq.s32.totalorder %s27, 7
      %p120 = por %p118, %p119
      %p122 = scmp.ne.s32.totalorder %s107, %s121
      %p123 = scmp.eq.s32.totalorder %s27, 0
      %p124 = por %p122, %p123
      %s126 = sadd.s32 %s125, 1
      %p129 = scmp.eq.s32.totalorder %s21, 7
      %p130 = scmp.ne.s32.totalorder %s125, %s127
      %p131 = scmp.eq.s32.totalorder %s21, 0
      %p132 = por %p130, %p131
      %p133 = scmp.ne.s32.totalorder %s125, %s127
      %p134 = scmp.eq.s32.totalorder %s26, 7
      %p135 = por %p133, %p134
      %p136 = scmp.ne.s32.totalorder %s127, %s128
      %p137 = scmp.eq.s32.totalorder %s26, 0
      %p138 = por %p136, %p137
      %p139 = scmp.ne.s32.totalorder %s127, %s128
      %p140 = scmp.eq.s32.totalorder %s27, 7
      %p141 = por %p139, %p140
      %p143 = scmp.ne.s32.totalorder %s128, %s142
      %p144 = scmp.eq.s32.totalorder %s27, 0
      %p145 = por %p143, %p144
      %s147 = sadd.s32 %s146, 1
      %p150 = scmp.eq.s32.totalorder %s21, 7
      %p151 = scmp.ne.s32.totalorder %s146, %s148
      %p152 = scmp.eq.s32.totalorder %s21, 0
      %p153 = por %p151, %p152
      %p154 = scmp.ne.s32.totalorder %s146, %s148
      %p155 = scmp.eq.s32.totalorder %s26, 7
      %p156 = por %p154, %p155
      %p157 = scmp.ne.s32.totalorder %s148, %s149
      %p158 = scmp.eq.s32.totalorder %s26, 0
      %p159 = por %p157, %p158
      %p160 = scmp.ne.s32.totalorder %s148, %s149
      %p161 = scmp.eq.s32.totalorder %s27, 7
      %p162 = por %p160, %p161
      %p164 = scmp.ne.s32.totalorder %s149, %s163
      %p165 = scmp.eq.s32.totalorder %s27, 0
      %p166 = por %p164, %p165
      %s167 = ssub.s32 %s28, %s47
      %s168 = ssub.s32 %s29, %s43
      %s169 = sor.u32 %s167, %s168
      %p170 = scmp.eq.s32.totalorder %s169, 0
      %s172 = sadd.s32 %s171, 1
      %s173 = scalar_select %p170, %s171, %s172
      %p176 = pneg %p170
      %p177 = scmp.eq.s32.totalorder %s21, 7
      %p178 = por %p176, %p177
      %p179 = scmp.ne.s32.totalorder %s171, %s174
      %p180 = scmp.eq.s32.totalorder %s21, 0
      %p181 = por %p179, %p180
      %p182 = scmp.ne.s32.totalorder %s171, %s174
      %p183 = scmp.eq.s32.totalorder %s26, 7
      %p184 = por %p182, %p183
      %p185 = scmp.ne.s32.totalorder %s174, %s175
      %p186 = scmp.eq.s32.totalorder %s26, 0
      %p187 = por %p185, %p186
      %p188 = scmp.ne.s32.totalorder %s174, %s175
      %p189 = scmp.eq.s32.totalorder %s27, 7
      %p190 = por %p188, %p189
      %p192 = scmp.ne.s32.totalorder %s175, %s191
      %p193 = scmp.eq.s32.totalorder %s27, 0
      %p194 = por %p192, %p193
      %p195 = scmp.le.s32.totalorder 1, %s21
      %p196 = scmp.lt.s32.totalorder %s21, 9
      %p197 = pnand %p195, %p196
      %p198 = pneg %p197
      // Predicated region
      $region9: #{tpu_custom_call.1} parent=5 // pred_check
        _
      $region10: #{tpu_custom_call.1} parent=5 // pred_check_branch
        %200 = sbr.rel (%p197) target = $region12
      $region11: #{tpu_custom_call.1} parent=5 // pred_region
        %s201 = ssub.s32 %s21, 1
        // Predicated region
        $region13: #{tpu_custom_call.1} parent=11 // pred_check
          %p202 = pneg %p117
        $region14: #{tpu_custom_call.1} parent=11 // pred_check_branch
          %204 = sbr.rel (%p202) target = $region16
        $region15: #{tpu_custom_call.1} parent=11 // pred_region
          _
        $region16: #{tpu_custom_call.1} parent=11 // pred_fallthru
          _
        // Predicated region
        $region17: #{tpu_custom_call.1} parent=11 // pred_check
          %p205 = pneg %p138
        $region18: #{tpu_custom_call.1} parent=11 // pred_check_branch
          %207 = sbr.rel (%p205) target = $region20
        $region19: #{tpu_custom_call.1} parent=11 // pred_region
          %s209 = ssub.s32 128, 128
          %210 = vsyncadd [#allocation11], %s209
          %s211 = sshll.u32 [#allocation12], 4
          %s212 = int_to_ptr.vmem [resolvable:$true] %s211
          %217 = dma.hbm_to_vmem [thread:$0]  %s3, 128, %s212, [#allocation11], 64, 64, 4
        $region20: #{tpu_custom_call.1} parent=11 // pred_fallthru
          _
        // Predicated region
        $region21: #{tpu_custom_call.1} parent=11 // pred_check
          %p218 = pneg %p159
        $region22: #{tpu_custom_call.1} parent=11 // pred_check_branch
          %220 = sbr.rel (%p218) target = $region24
        $region23: #{tpu_custom_call.1} parent=11 // pred_region
          _
        $region24: #{tpu_custom_call.1} parent=11 // pred_fallthru
          _
      $region12: #{tpu_custom_call.1} parent=5 // pred_fallthru
        _
      %p221 = scmp.lt.s32.totalorder %s21, 8
      // Predicated region
      $region25: #{tpu_custom_call.1} parent=5 // pred_check
        %p222 = pneg %p221
      $region26: #{tpu_custom_call.1} parent=5 // pred_check_branch
        %224 = sbr.rel (%p222) target = $region28
      $region27: #{tpu_custom_call.1} parent=5 // pred_region
        // Predicated region
        $region29: #{tpu_custom_call.1} parent=27 // pred_check
          %p225 = pneg %p62
        $region30: #{tpu_custom_call.1} parent=27 // pred_check_branch
          %227 = sbr.rel (%p225) target = $region32
        $region31: #{tpu_custom_call.1} parent=27 // pred_region
          %s228 = sand.u32 %s52, 1
          %s229 = scalar_lea.sflag [#allocation8], %s228
          %s230 = sand.u32 %s52, 1
          %s231 = smul.addr %s230, 8
          %s232 = scalar_lea.vmem [#allocation7], %s231
          %s234 = ssub.s32 128, 128
          %235 = vsyncadd %s229, %s234
          %s236 = smul.addr %s28, 4
          %s237 = sadd.s32 %s29, %s236
          %s238 = smul.addr %s237, 64
          %s239 = scalar_lea.hbm %s0, %s238
          %s240 = sshll.u32 %s232, 4
          %s241 = int_to_ptr.vmem [resolvable:$true] %s240
          %246 = dma.hbm_to_vmem [thread:$0]  %s239, 128, %s241, %s229, 128, 64, 4
        $region32: #{tpu_custom_call.1} parent=27 // pred_fallthru
          _
        // Predicated region
        $region33: #{tpu_custom_call.1} parent=27 // pred_check
          %p247 = pneg %p90
        $region34: #{tpu_custom_call.1} parent=27 // pred_check_branch
          %249 = sbr.rel (%p247) target = $region36
        $region35: #{tpu_custom_call.1} parent=27 // pred_region
          %s250 = sand.u32 %s21, 1
          %s251 = scalar_lea.sflag [#allocation11], %s250
          %s252 = sand.u32 %s80, 1
          %s253 = smul.addr %s252, 8
          %s254 = scalar_lea.vmem [#allocation10], %s253
          %s256 = ssub.s32 128, 128
          %257 = vsyncadd %s251, %s256
          %s258 = smul.addr %s28, 4
          %s259 = sadd.s32 %s30, %s258
          %s260 = smul.addr %s259, 64
          %s261 = scalar_lea.hbm %s1, %s260
          %s262 = sshll.u32 %s254, 4
          %s263 = int_to_ptr.vmem [resolvable:$true] %s262
          %268 = dma.hbm_to_vmem [thread:$0]  %s261, 128, %s263, %s251, 128, 64, 4
        $region36: #{tpu_custom_call.1} parent=27 // pred_fallthru
          _
      $region28: #{tpu_custom_call.1} parent=5 // pred_fallthru
        _
      %p269 = scmp.le.s32.totalorder 1, %s21
      %p270 = scmp.lt.s32.totalorder %s21, 9
      %p271 = pnand %p269, %p270
      %p272 = pneg %p271
      // Predicated region
      $region37: #{tpu_custom_call.1} parent=5 // pred_check
        _
      $region38: #{tpu_custom_call.1} parent=5 // pred_check_branch
        %274 = sbr.rel (%p271) target = $region40
      $region39: #{tpu_custom_call.1} parent=5 // pred_region
        %s275 = ssub.s32 %s21, 1
        %s276 = sand.u32 %s55, 1
        %s277 = scalar_lea.sflag [#allocation8], %s276
        %s278 = sand.u32 %s55, 1
        %s279 = smul.addr %s278, 8
        %s280 = scalar_lea.vmem [#allocation7], %s279
        // Predicated region
        $region41: #{tpu_custom_call.1} parent=39 // pred_check
          %p281 = pneg %p68
        $region42: #{tpu_custom_call.1} parent=39 // pred_check_branch
          %283 = sbr.rel (%p281) target = $region44
        $region43: #{tpu_custom_call.1} parent=39 // pred_region
          %284 = dma.done %s277, 128
        $region44: #{tpu_custom_call.1} parent=39 // pred_fallthru
          _
        %s285 = sand.u32 %s26, 1
        %s286 = scalar_lea.sflag [#allocation11], %s285
        %s287 = sand.u32 %s83, 1
        %s288 = smul.addr %s287, 8
        %s289 = scalar_lea.vmem [#allocation10], %s288
        // Predicated region
        $region45: #{tpu_custom_call.1} parent=39 // pred_check
          %p290 = pneg %p96
        $region46: #{tpu_custom_call.1} parent=39 // pred_check_branch
          %292 = sbr.rel (%p290) target = $region48
        $region47: #{tpu_custom_call.1} parent=39 // pred_region
          %293 = dma.done %s286, 128
        $region48: #{tpu_custom_call.1} parent=39 // pred_fallthru
          _
        // Predicated region
        $region49: #{tpu_custom_call.1} parent=39 // pred_check
          %p294 = pneg %p138
        $region50: #{tpu_custom_call.1} parent=39 // pred_check_branch
          %296 = sbr.rel (%p294) target = $region52
        $region51: #{tpu_custom_call.1} parent=39 // pred_region
          %297 = dma.done [#allocation11], 128
        $region52: #{tpu_custom_call.1} parent=39 // pred_fallthru
          _
        %s298 = sand.u32 %s55, 1
        %s299 = scalar_lea.sflag [#allocation8], %s298
        %s300 = sand.u32 %s55, 1
        %s301 = smul.addr %s300, 8
        %s302 = scalar_lea.vmem [#allocation7], %s301
        %p303 = pneg %p68
        %p304 = pneg %p65
        %s305 = sand.u32 %s26, 1
        %s306 = scalar_lea.sflag [#allocation11], %s305
        %s307 = sand.u32 %s83, 1
        %s308 = smul.addr %s307, 8
        %s309 = scalar_lea.vmem [#allocation10], %s308
        %p310 = pneg %p96
        %p311 = pneg %p93
        %p312 = pneg %p117
        %p313 = pneg %p114
        %p314 = pneg %p138
        %p315 = pneg %p135
        %p316 = pneg %p159
        %p317 = pneg %p156
        %p318 = pneg %p187
        %p319 = pneg %p184
        %s320 = sand.u32 %s174, 1
        %s321 = scalar_lea.sflag [#allocation9], %s320
        %s322 = sand.u32 %s174, 1
        %s323 = smul.addr %s322, 16
        %s324 = scalar_lea.vmem [#allocation13], %s323
        %p326 = scmp.eq.s32.totalorder %s33, 0
        // Predicated region
        $region53: #{tpu_custom_call.1} parent=39 // pred_check
          %p327 = pneg %p326
        $region54: #{tpu_custom_call.1} parent=39 // pred_check_branch
          %329 = sbr.rel (%p327) target = $region56
        $region55: #{tpu_custom_call.1} parent=39 // pred_region
          %v330 = vld [vmem:[%s280] sm:$0xf]
          %v331 = vld [vmem:[%s280 + $0x4] sm:$0xf]
          %v332 = vld [vmem:[%s2] sm:$0xf]
          %v333 = vld [vmem:[%s2 + $0x4] sm:$0xf]
          %v336 = vunpack.c.l.b16 %v332
          %v337 = vunpack.c.l.b16 %v333
          %v338 = vpack.c.b16 %v337, %v336
          %v341 = vunpack.c.l.b16 %v330
          %v342 = vunpack.c.l.b16 %v331
          %v343 = vpack.c.b16 %v342, %v341
          %vm345 = vcmask 130048
          %v347 = vsel %vm345, %v338, 0
          %349 = vmatprep.subr.bf16.mxu0 0
          %350 = vmatpush1.bf16.msra.mxu0 %v343
          %351 = vmatprep.subr.bf16.mxu0 0
          %352 = vmatpush1.bf16.msra.mxu0 0
          %353 = vmatprep.subr.bf16.mxu0 0
          %354 = vmatpush1.bf16.msra.mxu0 0
          %355 = vmatprep.subr.bf16.mxu0 0
          %356 = vmatpush1.bf16.msra.mxu0 0
          %357 = vmatprep.subr.bf16.mxu0 0
          %358 = vmatpush1.bf16.msra.mxu0 0
          %359 = vmatprep.subr.bf16.mxu0 0
          %360 = vmatpush1.bf16.msra.mxu0 0
          %361 = vmatprep.subr.bf16.mxu0 0
          %362 = vmatpush1.bf16.msra.mxu0 0
          %363 = vmatprep.subr.bf16.mxu0 0
          %364 = vmatpush1.bf16.msra.mxu0 0
          %365 = vmatprep.subr.bf16.mxu0 0
          %366 = vmatpush1.bf16.msra.mxu0 0
          %367 = vmatprep.subr.bf16.mxu0 0
          %368 = vmatpush1.bf16.msra.mxu0 0
          %369 = vmatprep.subr.bf16.mxu0 0
          %370 = vmatpush1.bf16.msra.mxu0 0
          %371 = vmatprep.subr.bf16.mxu0 0
          %372 = vmatpush1.bf16.msra.mxu0 0
          %373 = vmatprep.subr.bf16.mxu0 0
          %374 = vmatpush1.bf16.msra.mxu0 0
          %375 = vmatprep.subr.bf16.mxu0 0
          %376 = vmatpush1.bf16.msra.mxu0 0
          %377 = vmatprep.subr.bf16.mxu0 0
          %378 = vmatpush1.bf16.msra.mxu0 0
          %379 = vmatprep.subr.bf16.mxu0 0
          %380 = vmatpush1.bf16.msra.mxu0 0
          %381 = vmatprep.mubr.bf16.mxu0 0
          %382 = vmatmul.mubr.bf16.gmra.mrb[0].mxu0 %v347
          %v383 = vpop.f32.mrb[0].mxu0
          %v384 = vadd.f32 0.0, %v383
          %v385 = vpop.f32.mrb[0].mxu0
          %v386 = vpop.f32.mrb[0].mxu0
          %v387 = vadd.f32 0.0, %v386
          %v388 = vpop.f32.mrb[0].mxu0
          %389 = vdwg.mxu0
          %v390 = vpack.c.bf16 %v387, %v384
          %391 = vst [vmem:[#allocation2] sm:$0xff] %v390
          %392 = vst [vmem:[#allocation3] sm:$0x1] -1e+30
          %393 = vst [vmem:[#allocation4] sm:$0x1] 0.0
          %394 = vst [vmem:[#allocation5] sm:$0xff] 0.0
          %395 = vst [vmem:[#allocation5 + $0x8] sm:$0xff] 0.0
        $region56: #{tpu_custom_call.1} parent=39 // pred_fallthru
          _
        %v396 = vld [vmem:[%s289] sm:$0xf]
        %v397 = vld [vmem:[%s289 + $0x4] sm:$0xf]
        %v398 = vld [vmem:[#allocation2] sm:$0xff]
        %v401 = vunpack.c.l.b16 %v396
        %v402 = vunpack.c.l.b16 %v397
        %v403 = vpack.c.b16 %v402, %v401
        %405 = vxpose.xlu0.c.b16.start [1/8] %v403, 128
        %406 = vxpose.xlu0.c.b16.cont [2/8] 0, 128
        %407 = vxpose.xlu0.c.b16.cont [3/8] 0, 128
        %408 = vxpose.xlu0.c.b16.cont [4/8] 0, 128
        %409 = vxpose.xlu0.c.b16.cont [5/8] 0, 128
        %410 = vxpose.xlu0.c.b16.cont [6/8] 0, 128
        %411 = vxpose.xlu0.c.b16.cont [7/8] 0, 128
        %412 = vxpose.xlu0.c.b16.end [8/8] 0, 128
        %v413 = vpop.trf.xlu0
        %v414 = vpop.trf.xlu0
        %v415 = vpop.trf.xlu0
        %v416 = vpop.trf.xlu0
        %v417 = vpop.trf.xlu0
        %v418 = vpop.trf.xlu0
        %v419 = vpop.trf.xlu0
        %v420 = vpop.trf.xlu0
        %vm421 = vcmask 130048
        %v423 = vsel %vm421, %v413, 0
        %v426 = vsel %vm421, %v414, 0
        %v429 = vsel %vm421, %v415, 0
        %v432 = vsel %vm421, %v416, 0
        %v435 = vsel %vm421, %v417, 0
        %v438 = vsel %vm421, %v418, 0
        %v441 = vsel %vm421, %v419, 0
        %v444 = vsel %vm421, %v420, 0
        %446 = vmatprep.subr.bf16.mxu0 0
        %447 = vmatpush1.bf16.msra.mxu0 %v398
        %448 = vmatprep.subr.bf16.mxu0 0
        %449 = vmatpush1.bf16.msra.mxu0 0
        %450 = vmatprep.subr.bf16.mxu0 0
        %451 = vmatpush1.bf16.msra.mxu0 0
        %452 = vmatprep.subr.bf16.mxu0 0
        %453 = vmatpush1.bf16.msra.mxu0 0
        %454 = vmatprep.subr.bf16.mxu0 0
        %455 = vmatpush1.bf16.msra.mxu0 0
        %456 = vmatprep.subr.bf16.mxu0 0
        %457 = vmatpush1.bf16.msra.mxu0 0
        %458 = vmatprep.subr.bf16.mxu0 0
        %459 = vmatpush1.bf16.msra.mxu0 0
        %460 = vmatprep.subr.bf16.mxu0 0
        %461 = vmatpush1.bf16.msra.mxu0 0
        %462 = vmatprep.subr.bf16.mxu0 0
        %463 = vmatpush1.bf16.msra.mxu0 0
        %464 = vmatprep.subr.bf16.mxu0 0
        %465 = vmatpush1.bf16.msra.mxu0 0
        %466 = vmatprep.subr.bf16.mxu0 0
        %467 = vmatpush1.bf16.msra.mxu0 0
        %468 = vmatprep.subr.bf16.mxu0 0
        %469 = vmatpush1.bf16.msra.mxu0 0
        %470 = vmatprep.subr.bf16.mxu0 0
        %471 = vmatpush1.bf16.msra.mxu0 0
        %472 = vmatprep.subr.bf16.mxu0 0
        %473 = vmatpush1.bf16.msra.mxu0 0
        %474 = vmatprep.subr.bf16.mxu0 0
        %475 = vmatpush1.bf16.msra.mxu0 0
        %476 = vmatprep.subr.bf16.mxu0 0
        %477 = vmatpush1.bf16.msra.mxu0 0
        %478 = vmatprep.mubr.bf16.mxu0 0
        %479 = vmatmul.mubr.bf16.gmra.mrb[0].mxu0 %v423
        %v480 = vpop.f32.mrb[0].mxu0
        %v481 = vadd.f32 0.0, %v480
        %v482 = vpop.f32.mrb[0].mxu0
        %v483 = vpop.f32.mrb[0].mxu0
        %v484 = vadd.f32 0.0, %v483
        %v485 = vpop.f32.mrb[0].mxu0
        %486 = vmatprep.mubr.bf16.mxu0 0
        %487 = vmatmul.mubr.bf16.gmra.mrb[0].mxu0 %v426
        %v488 = vpop.f32.mrb[0].mxu0
        %v489 = vadd.f32 0.0, %v488
        %v490 = vpop.f32.mrb[0].mxu0
        %v491 = vpop.f32.mrb[0].mxu0
        %v492 = vadd.f32 0.0, %v491
        %v493 = vpop.f32.mrb[0].mxu0
        %494 = vmatprep.mubr.bf16.mxu0 0
        %495 = vmatmul.mubr.bf16.gmra.mrb[0].mxu0 %v429
        %v496 = vpop.f32.mrb[0].mxu0
        %v497 = vadd.f32 0.0, %v496
        %v498 = vpop.f32.mrb[0].mxu0
        %v499 = vpop.f32.mrb[0].mxu0
        %v500 = vadd.f32 0.0, %v499
        %v501 = vpop.f32.mrb[0].mxu0
        %502 = vmatprep.mubr.bf16.mxu0 0
        %503 = vmatmul.mubr.bf16.gmra.mrb[0].mxu0 %v432
        %v504 = vpop.f32.mrb[0].mxu0
        %v505 = vadd.f32 0.0, %v504
        %v506 = vpop.f32.mrb[0].mxu0
        %v507 = vpop.f32.mrb[0].mxu0
        %v508 = vadd.f32 0.0, %v507
        %v509 = vpop.f32.mrb[0].mxu0
        %510 = vmatprep.mubr.bf16.mxu0 0
        %511 = vmatmul.mubr.bf16.gmra.mrb[0].mxu0 %v435
        %v512 = vpop.f32.mrb[0].mxu0
        %v513 = vadd.f32 0.0, %v512
        %v514 = vpop.f32.mrb[0].mxu0
        %v515 = vpop.f32.mrb[0].mxu0
        %v516 = vadd.f32 0.0, %v515
        %v517 = vpop.f32.mrb[0].mxu0
        %518 = vmatprep.mubr.bf16.mxu0 0
        %519 = vmatmul.mubr.bf16.gmra.mrb[0].mxu0 %v438
        %v520 = vpop.f32.mrb[0].mxu0
        %v521 = vadd.f32 0.0, %v520
        %v522 = vpop.f32.mrb[0].mxu0
        %v523 = vpop.f32.mrb[0].mxu0
        %v524 = vadd.f32 0.0, %v523
        %v525 = vpop.f32.mrb[0].mxu0
        %526 = vmatprep.mubr.bf16.mxu0 0
        %527 = vmatmul.mubr.bf16.gmra.mrb[0].mxu0 %v441
        %v528 = vpop.f32.mrb[0].mxu0
        %v529 = vadd.f32 0.0, %v528
        %v530 = vpop.f32.mrb[0].mxu0
        %v531 = vpop.f32.mrb[0].mxu0
        %v532 = vadd.f32 0.0, %v531
        %v533 = vpop.f32.mrb[0].mxu0
        %534 = vmatprep.mubr.bf16.mxu0 0
        %535 = vmatmul.mubr.bf16.gmra.mrb[0].mxu0 %v444
        %v536 = vpop.f32.mrb[0].mxu0
        %v537 = vadd.f32 0.0, %v536
        %v538 = vpop.f32.mrb[0].mxu0
        %v539 = vpop.f32.mrb[0].mxu0
        %v540 = vadd.f32 0.0, %v539
        %v541 = vpop.f32.mrb[0].mxu0
        %542 = vdwg.mxu0
        %v543 = vld [vmem:[#allocation3] sm:$0x1]
        %v544 = vmax.f32 %v481, %v497
        %v545 = vmax.f32 %v484, %v500
        %v546 = vmax.f32 %v489, %v505
        %v547 = vmax.f32 %v492, %v508
        %v548 = vmax.f32 %v544, %v513
        %v549 = vmax.f32 %v545, %v516
        %v550 = vmax.f32 %v546, %v521
        %v551 = vmax.f32 %v547, %v524
        %v552 = vmax.f32 %v548, %v529
        %v553 = vmax.f32 %v549, %v532
        %v554 = vmax.f32 %v550, %v537
        %v555 = vmax.f32 %v551, %v540
        %v556 = vmax.f32 %v552, %v553
        %v557 = vmax.f32 %v554, %v555
        %v558 = vmax.f32 %v556, %v557
        %v559 = vrot.slane %v558, 4
        %v560 = vmax.f32 %v558, %v559
        %v561 = vrot.slane %v560, 2
        %v562 = vmax.f32 %v560, %v561
        %v563 = vrot.slane %v562, 1
        %v564 = vmax.f32 %v562, %v563
        %v565 = vmax.f32 %v543, %v564
        %v566 = vsub.f32 %v543, %v565
        %v567 = vmul.f32 %v566, 1.442695
        %v568 = vpow.pop %v567
        %v570 = vlaneseq
        %v571 = vshrl.u32 %v570, 7
        %v572 = vsub.s32 0, %v571
        %v573 = vrot.slane %v565, %v572
        %v575 = vsub.f32 %v481, %v573
        %v576 = vsub.f32 %v484, %v573
        %v577 = vsub.f32 %v489, %v573
        %v578 = vsub.f32 %v492, %v573
        %v579 = vsub.f32 %v497, %v573
        %v580 = vsub.f32 %v500, %v573
        %v581 = vsub.f32 %v505, %v573
        %v582 = vsub.f32 %v508, %v573
        %v583 = vsub.f32 %v513, %v573
        %v584 = vsub.f32 %v516, %v573
        %v585 = vsub.f32 %v521, %v573
        %v586 = vsub.f32 %v524, %v573
        %v587 = vsub.f32 %v529, %v573
        %v588 = vsub.f32 %v532, %v573
        %v589 = vsub.f32 %v537, %v573
        %v590 = vsub.f32 %v540, %v573
        %v591 = vmul.f32 %v575, 1.442695
        %v592 = vpow.pop %v591
        %v593 = vmul.f32 %v576, 1.442695
        %v594 = vpow.pop %v593
        %v595 = vmul.f32 %v577, 1.442695
        %v596 = vpow.pop %v595
        %v597 = vmul.f32 %v578, 1.442695
        %v598 = vpow.pop %v597
        %v599 = vmul.f32 %v579, 1.442695
        %v600 = vpow.pop %v599
        %v601 = vmul.f32 %v580, 1.442695
        %v602 = vpow.pop %v601
        %v603 = vmul.f32 %v581, 1.442695
        %v604 = vpow.pop %v603
        %v605 = vmul.f32 %v582, 1.442695
        %v606 = vpow.pop %v605
        %v607 = vmul.f32 %v583, 1.442695
        %v608 = vpow.pop %v607
        %v609 = vmul.f32 %v584, 1.442695
        %v610 = vpow.pop %v609
        %v611 = vmul.f32 %v585, 1.442695
        %v612 = vpow.pop %v611
        %v613 = vmul.f32 %v586, 1.442695
        %v614 = vpow.pop %v613
        %v615 = vmul.f32 %v587, 1.442695
        %v616 = vpow.pop %v615
        %v617 = vmul.f32 %v588, 1.442695
        %v618 = vpow.pop %v617
        %v619 = vmul.f32 %v589, 1.442695
        %v620 = vpow.pop %v619
        %v621 = vmul.f32 %v590, 1.442695
        %v622 = vpow.pop %v621
        %v623 = vld [vmem:[#allocation4] sm:$0x1]
        %v624 = vmul.f32 %v568, %v623
        %v625 = vadd.f32 %v592, %v594
        %v626 = vadd.f32 %v625, %v596
        %v627 = vadd.f32 %v626, %v598
        %v628 = vadd.f32 %v627, %v600
        %v629 = vadd.f32 %v628, %v602
        %v630 = vadd.f32 %v629, %v604
        %v631 = vadd.f32 %v630, %v606
        %v632 = vadd.f32 %v631, %v608
        %v633 = vadd.f32 %v632, %v610
        %v634 = vadd.f32 %v633, %v612
        %v635 = vadd.f32 %v634, %v614
        %v636 = vadd.f32 %v635, %v616
        %v637 = vadd.f32 %v636, %v618
        %v638 = vadd.f32 %v637, %v620
        %v639 = vadd.f32 %v638, %v622
        %v640 = vrot.slane %v639, 4
        %v641 = vadd.f32 %v639, %v640
        %v642 = vrot.slane %v641, 2
        %v643 = vadd.f32 %v641, %v642
        %v644 = vrot.slane %v643, 1
        %v645 = vadd.f32 %v643, %v644
        %v646 = vadd.f32 %v624, %v645
        %647 = vst [vmem:[#allocation4] sm:$0x1] %v646
        %648 = vst [vmem:[#allocation3] sm:$0x1] %v565
        %v649 = vld [vmem:[#allocation5] sm:$0xff]
        %v650 = vld [vmem:[#allocation5 + $0x8] sm:$0xff]
        %v652 = vlaneseq
        %v653 = vshrl.u32 %v652, 7
        %v654 = vsub.s32 0, %v653
        %v655 = vrot.slane %v568, %v654
        %v657 = vmul.f32 %v655, %v649
        %v658 = vmul.f32 %v655, %v650
        %v659 = vpack.c.bf16 %v594, %v592
        %v660 = vpack.c.bf16 %v598, %v596
        %v661 = vpack.c.bf16 %v602, %v600
        %v662 = vpack.c.bf16 %v606, %v604
        %v663 = vpack.c.bf16 %v610, %v608
        %v664 = vpack.c.bf16 %v614, %v612
        %v665 = vpack.c.bf16 %v618, %v616
        %v666 = vpack.c.bf16 %v622, %v620
        %667 = vmatprep.subr.bf16.mxu0 0
        %668 = vmatpush1.bf16.msra.mxu0 %v659
        %669 = vmatprep.subr.bf16.mxu0 0
        %670 = vmatpush1.bf16.msra.mxu0 %v660
        %671 = vmatprep.subr.bf16.mxu0 0
        %672 = vmatpush1.bf16.msra.mxu0 %v661
        %673 = vmatprep.subr.bf16.mxu0 0
        %674 = vmatpush1.bf16.msra.mxu0 %v662
        %675 = vmatprep.subr.bf16.mxu0 0
        %676 = vmatpush1.bf16.msra.mxu0 %v663
        %677 = vmatprep.subr.bf16.mxu0 0
        %678 = vmatpush1.bf16.msra.mxu0 %v664
        %679 = vmatprep.subr.bf16.mxu0 0
        %680 = vmatpush1.bf16.msra.mxu0 %v665
        %681 = vmatprep.subr.bf16.mxu0 0
        %682 = vmatpush1.bf16.msra.mxu0 %v666
        %683 = vmatprep.subr.bf16.mxu0 0
        %684 = vmatpush1.bf16.msra.mxu0 0
        %685 = vmatprep.subr.bf16.mxu0 0
        %686 = vmatpush1.bf16.msra.mxu0 0
        %687 = vmatprep.subr.bf16.mxu0 0
        %688 = vmatpush1.bf16.msra.mxu0 0
        %689 = vmatprep.subr.bf16.mxu0 0
        %690 = vmatpush1.bf16.msra.mxu0 0
        %691 = vmatprep.subr.bf16.mxu0 0
        %692 = vmatpush1.bf16.msra.mxu0 0
        %693 = vmatprep.subr.bf16.mxu0 0
        %694 = vmatpush1.bf16.msra.mxu0 0
        %695 = vmatprep.subr.bf16.mxu0 0
        %696 = vmatpush1.bf16.msra.mxu0 0
        %697 = vmatprep.subr.bf16.mxu0 0
        %698 = vmatpush1.bf16.msra.mxu0 0
        %699 = vmatprep.mubr.bf16.mxu0 0
        %700 = vmatmul.mubr.bf16.gmra.mrb[0].mxu0 %v403
        %v701 = vpop.f32.mrb[0].mxu0
        %v702 = vadd.f32 0.0, %v701
        %v703 = vpop.f32.mrb[0].mxu0
        %v704 = vpop.f32.mrb[0].mxu0
        %v705 = vadd.f32 0.0, %v704
        %v706 = vpop.f32.mrb[0].mxu0
        %707 = vdwg.mxu0
        %v708 = vadd.f32 %v657, %v702
        %v709 = vadd.f32 %v658, %v705
        %710 = vst [vmem:[#allocation5] sm:$0xff] %v708
        %711 = vst [vmem:[#allocation5 + $0x8] sm:$0xff] %v709
        %p712 = scmp.eq.s32.totalorder %s33, 1
        // Predicated region
        $region57: #{tpu_custom_call.1} parent=39 // pred_check
          %p713 = pneg %p712
        $region58: #{tpu_custom_call.1} parent=39 // pred_check_branch
          %715 = sbr.rel (%p713) target = $region60
        $region59: #{tpu_custom_call.1} parent=39 // pred_region
          %v716 = vld [vmem:[#allocation4] sm:$0x1]
          %v717 = vrcp.pop %v716
          %v718 = vld [vmem:[#allocation5] sm:$0xff]
          %v719 = vld [vmem:[#allocation5 + $0x8] sm:$0xff]
          %v721 = vlaneseq
          %v722 = vshrl.u32 %v721, 7
          %v723 = vsub.s32 0, %v722
          %v724 = vrot.slane %v717, %v723
          %v726 = vmul.f32 %v718, %v724
          %v727 = vmul.f32 %v719, %v724
          %v728 = vpack.c.bf16 %v727, %v726
          %v729 = vld [vmem:[#allocation12] sm:$0xf]
          %v730 = vld [vmem:[#allocation12 + $0x4] sm:$0xf]
          %v733 = vunpack.c.l.b16 %v729
          %v734 = vunpack.c.l.b16 %v730
          %v735 = vpack.c.b16 %v734, %v733
          %v737 = vsel %vm421, %v735, 0
          %739 = vmatprep.subr.bf16.mxu0 0
          %740 = vmatpush1.bf16.msra.mxu0 %v728
          %741 = vmatprep.subr.bf16.mxu0 0
          %742 = vmatpush1.bf16.msra.mxu0 0
          %743 = vmatprep.subr.bf16.mxu0 0
          %744 = vmatpush1.bf16.msra.mxu0 0
          %745 = vmatprep.subr.bf16.mxu0 0
          %746 = vmatpush1.bf16.msra.mxu0 0
          %747 = vmatprep.subr.bf16.mxu0 0
          %748 = vmatpush1.bf16.msra.mxu0 0
          %749 = vmatprep.subr.bf16.mxu0 0
          %750 = vmatpush1.bf16.msra.mxu0 0
          %751 = vmatprep.subr.bf16.mxu0 0
          %752 = vmatpush1.bf16.msra.mxu0 0
          %753 = vmatprep.subr.bf16.mxu0 0
          %754 = vmatpush1.bf16.msra.mxu0 0
          %755 = vmatprep.subr.bf16.mxu0 0
          %756 = vmatpush1.bf16.msra.mxu0 0
          %757 = vmatprep.subr.bf16.mxu0 0
          %758 = vmatpush1.bf16.msra.mxu0 0
          %759 = vmatprep.subr.bf16.mxu0 0
          %760 = vmatpush1.bf16.msra.mxu0 0
          %761 = vmatprep.subr.bf16.mxu0 0
          %762 = vmatpush1.bf16.msra.mxu0 0
          %763 = vmatprep.subr.bf16.mxu0 0
          %764 = vmatpush1.bf16.msra.mxu0 0
          %765 = vmatprep.subr.bf16.mxu0 0
          %766 = vmatpush1.bf16.msra.mxu0 0
          %767 = vmatprep.subr.bf16.mxu0 0
          %768 = vmatpush1.bf16.msra.mxu0 0
          %769 = vmatprep.subr.bf16.mxu0 0
          %770 = vmatpush1.bf16.msra.mxu0 0
          %771 = vmatprep.mubr.bf16.mxu0 0
          %772 = vmatmul.mubr.bf16.gmra.mrb[0].mxu0 %v737
          %v773 = vpop.f32.mrb[0].mxu0
          %v774 = vadd.f32 0.0, %v773
          %v775 = vpop.f32.mrb[0].mxu0
          %v776 = vpop.f32.mrb[0].mxu0
          %v777 = vadd.f32 0.0, %v776
          %v778 = vpop.f32.mrb[0].mxu0
          %779 = vdwg.mxu0
          %v780 = vld [vmem:[%s280] sm:$0xf]
          %v781 = vld [vmem:[%s280 + $0x4] sm:$0xf]
          %v782 = vunpack.c.l.bf16 %v780
          %v783 = vunpack.c.l.bf16 %v781
          %s784 = sld [smem:[#allocation6]]
          %v785 = vstv %s784
          %v786 = vmul.f32 %v785, %v774
          %v787 = vmul.f32 %v785, %v777
          %v788 = vadd.f32 %v786, %v782
          %v789 = vadd.f32 %v787, %v783
          %790 = vst [vmem:[%s324] sm:$0xff] %v788
          %791 = vst [vmem:[%s324 + $0x8] sm:$0xff] %v789
        $region60: #{tpu_custom_call.1} parent=39 // pred_fallthru
          _
        %s792 = sand.u32 %s174, 1
        %s793 = scalar_lea.sflag [#allocation9], %s792
        %s794 = sand.u32 %s174, 1
        %s795 = smul.addr %s794, 16
        %s796 = scalar_lea.vmem [#allocation13], %s795
        // Predicated region
        $region61: #{tpu_custom_call.1} parent=39 // pred_check
          %p797 = pneg %p184
        $region62: #{tpu_custom_call.1} parent=39 // pred_check_branch
          %799 = sbr.rel (%p797) target = $region64
        $region63: #{tpu_custom_call.1} parent=39 // pred_region
          %s801 = ssub.s32 256, 256
          %802 = vsyncadd %s793, %s801
          %s803 = smul.addr %s31, 4
          %s804 = sadd.s32 %s32, %s803
          %s805 = smul.addr %s804, 128
          %s806 = scalar_lea.hbm %s5, %s805
          %s807 = sshll.u32 %s796, 4
          %s808 = int_to_ptr.vmem [resolvable:$true] %s807
          %813 = dma.vmem_to_hbm [thread:$0]  %s808, 256, %s806, %s793, 128, 256, 8
        $region64: #{tpu_custom_call.1} parent=39 // pred_fallthru
          _
      $region40: #{tpu_custom_call.1} parent=5 // pred_fallthru
        _
      %p814 = scmp.le.s32.totalorder 2, %s21
      // Predicated region
      $region65: #{tpu_custom_call.1} parent=5 // pred_check
        %p815 = pneg %p814
      $region66: #{tpu_custom_call.1} parent=5 // pred_check_branch
        %817 = sbr.rel (%p815) target = $region68
      $region67: #{tpu_custom_call.1} parent=5 // pred_region
        %s818 = ssub.s32 %s21, 2
        // Predicated region
        $region69: #{tpu_custom_call.1} parent=67 // pred_check
          %p819 = pneg %p190
        $region70: #{tpu_custom_call.1} parent=67 // pred_check_branch
          %821 = sbr.rel (%p819) target = $region72
        $region71: #{tpu_custom_call.1} parent=67 // pred_region
          %s822 = sand.u32 %s175, 1
          %s823 = scalar_lea.sflag [#allocation9], %s822
          %s824 = sand.u32 %s175, 1
          %s825 = smul.addr %s824, 16
          %s826 = scalar_lea.vmem [#allocation13], %s825
          %827 = dma.done %s823, 256
        $region72: #{tpu_custom_call.1} parent=67 // pred_fallthru
          _
      $region68: #{tpu_custom_call.1} parent=5 // pred_fallthru
        _
    $region6: #{tpu_custom_call.1} parent=1 // loop_footer
      %s25 = sadd.s32 1, %s21
    $region7: #{tpu_custom_call.1} parent=1 // loop_footer_branch
      %20 = sbr.rel target = $region3
    $region8: #{tpu_custom_call.1} parent=1 // loop_exit
      _
    %828 = vsyncpa [#allocation8], 1
    %s829 = scalar_lea.sflag [#allocation8], 1
    %830 = vsyncpa %s829, 1
    %831 = vsyncpa [#allocation11], 1
    %s832 = scalar_lea.sflag [#allocation11], 1
    %833 = vsyncpa %s832, 1
    %834 = vsyncpa [#allocation9], 1
    %s835 = scalar_lea.sflag [#allocation9], 1
    %836 = vsyncpa %s835, 1

</llo_original>
